<compile_context>
chip_gen: v7x
topology: tpu7x:2x2x1
jax: 0.10.0
libtpu: 0.0.40
codegen_flags: <defaults>
</compile_context>

<pallas_src>
import functools

import jax
import jax.numpy as jnp
from jax.experimental import pallas as pl
from jax.experimental.pallas import tpu as pltpu

LANE = 128  # TPU lane width; feature dims are padded to multiples of this.


def _round_up(v, m):
    return (v + m - 1) // m * m


def _pad2d(x, rows, cols):
    r, c = x.shape
    return jnp.pad(x, ((0, rows - r), (0, cols - c)))


def build_normalized_adjacency(edge_index, num_nodes):
    """Dense Â = D^{-1/2}(A+I)D^{-1/2}, matching PyG GCNConv gcn_norm (plain JAX glue)."""
    src = edge_index[0]
    dst = edge_index[1]
    a = jnp.zeros((num_nodes, num_nodes), jnp.float32)
    # message flows src -> dst; aggregation at dst  =>  A[dst, src] = 1
    a = a.at[dst, src].add(1.0)
    a = jnp.minimum(a, 1.0)                        # guard against duplicate edges
    a = a + jnp.eye(num_nodes, dtype=jnp.float32)  # add self-loops
    deg = a.sum(axis=1)                            # degree incl. self-loop
    d_inv_sqrt = jnp.where(deg > 0, 1.0 / jnp.sqrt(deg), 0.0)
    return d_inv_sqrt[:, None] * a * d_inv_sqrt[None, :]


def gcn_layer_kernel(a_ref, x_ref, w_ref, b_ref, o_ref, acc_ref, *, apply_relu):
    """One tile-step of a GCNConv layer:

        acc[i_block] += Â[i_block, k_block] @ (X[k_block] @ W)
        at k == last:  out = acc + b  (optionally ReLU), stored lane-dense.
    """
    k = pl.program_id(1)

    @pl.when(k == 0)
    def _init():
        acc_ref[...] = jnp.zeros_like(acc_ref)

    # feature transform of this block of node rows (bf16 MXU, f32 accumulate)
    xw = jnp.dot(x_ref[...], w_ref[...], preferred_element_type=jnp.float32)
    # graph propagation: Â tile (bf16) x transformed features (cast back to bf16)
    acc_ref[...] += jnp.dot(
        a_ref[...], xw.astype(jnp.bfloat16), preferred_element_type=jnp.float32
    )

    @pl.when(k == pl.num_programs(1) - 1)
    def _finalize():
        out = acc_ref[...] + b_ref[...]
        if apply_relu:
            out = jnp.maximum(out, 0.0)
        o_ref[...] = out.astype(o_ref.dtype)


def gcn_conv(a_hat_bf16, x_bf16, w_bf16, b_f32, *, apply_relu, tile=128):
    """Â @ (X @ W) + b (optional ReLU), tiled over (node-row blocks, k-reduction)."""
    n_pad = a_hat_bf16.shape[0]
    f_in = x_bf16.shape[1]
    f_out = w_bf16.shape[1]
    grid = (n_pad // tile, n_pad // tile)
    kernel = functools.partial(gcn_layer_kernel, apply_relu=apply_relu)

    return pl.pallas_call(
        kernel,
        out_shape=jax.ShapeDtypeStruct((n_pad, f_out), jnp.float32),
        grid_spec=pltpu.PrefetchScalarGridSpec(
            num_scalar_prefetch=0,
            grid=grid,
            in_specs=[
                pl.BlockSpec((tile, tile), lambda i, k: (i, k)),     # Â tile
                pl.BlockSpec((tile, f_in), lambda i, k: (k, 0)),     # X rows (k block)
                pl.BlockSpec((f_in, f_out), lambda i, k: (0, 0)),    # W, VMEM-resident
                pl.BlockSpec((1, f_out), lambda i, k: (0, 0)),       # b, VMEM-resident
            ],
            out_specs=pl.BlockSpec((tile, f_out), lambda i, k: (i, 0)),
            scratch_shapes=[pltpu.VMEM((tile, f_out), jnp.float32)],
        ),
        compiler_params=pltpu.CompilerParams(
            dimension_semantics=("parallel", "arbitrary")
        ),
    )(a_hat_bf16, x_bf16, w_bf16, b_f32)


def gcn_forward(x, edge_index, w1, b1, w2, b2, *, tile=128):
    """Full forward of GCN_1_hidden_model (eval mode) using two fused Pallas layers."""
    n, in_dim = x.shape
    hid_dim = w1.shape[1]
    out_dim = w2.shape[1]

    n_pad = _round_up(n, tile)
    in_pad = _round_up(in_dim, LANE)
    hid_pad = _round_up(hid_dim, LANE)
    out_pad = _round_up(out_dim, LANE)

    a_hat = build_normalized_adjacency(edge_index, n)

    # zero-pad everything to lane-dense / tile-aligned shapes; cast matmul operands to bf16
    a_p = _pad2d(a_hat, n_pad, n_pad).astype(jnp.bfloat16)
    x_p = _pad2d(x, n_pad, in_pad).astype(jnp.bfloat16)
    w1_p = _pad2d(w1, in_pad, hid_pad).astype(jnp.bfloat16)
    b1_p = _pad2d(b1, 1, hid_pad).astype(jnp.float32)
    w2_p = _pad2d(w2, hid_pad, out_pad).astype(jnp.bfloat16)
    b2_p = _pad2d(b2, 1, out_pad).astype(jnp.float32)

    # ---- GCNConv layer 1 (+ fused ReLU) ----
    h = gcn_conv(a_p, x_p, w1_p, b1_p, apply_relu=True, tile=tile)

    # ---- Dropout(p=0.5) ----
    # TODO(synk): eval-mode identity; training-mode stochastic mask would use
    # pltpu.prng_seed / pltpu.prng_random_bits inside the kernel.

    # ---- GCNConv layer 2 ----
    out = gcn_conv(a_p, h.astype(jnp.bfloat16), w2_p, b2_p, apply_relu=False, tile=tile)

    # slice off node-row and feature-column padding
    return out[:n, :out_dim]


def init_params(key, in_dim, hid_dim, out_dim):
    """Deterministic glorot-style init (stand-in for GCNConv's reset_parameters)."""
    k1, k2 = jax.random.split(key)
    s1 = jnp.sqrt(6.0 / (in_dim + hid_dim))
    s2 = jnp.sqrt(6.0 / (hid_dim + out_dim))
    w1 = jax.random.uniform(k1, (in_dim, hid_dim), jnp.float32, -s1, s1)
    w2 = jax.random.uniform(k2, (hid_dim, out_dim), jnp.float32, -s2, s2)
    b1 = jnp.zeros((1, hid_dim), jnp.float32)
    b2 = jnp.zeros((1, out_dim), jnp.float32)
    return w1, b1, w2, b2


if __name__ == "__main__":
    key = jax.random.PRNGKey(0)
    kx, kp = jax.random.split(key)

    # small graph: 8 nodes, bidirectional ring (16 directed edges)
    N, IN_DIM, HID_DIM, OUT_DIM = 8, 8, 32, 4
    x = jax.random.normal(kx, (N, IN_DIM), jnp.float32)
    src = jnp.arange(N, dtype=jnp.int32)
    dst = (src + 1) % N
    edge_index = jnp.stack(
        [jnp.concatenate([src, dst]), jnp.concatenate([dst, src])], axis=0
    )  # [2, 16]

    w1, b1, w2, b2 = init_params(kp, IN_DIM, HID_DIM, OUT_DIM)

    out = gcn_forward(x, edge_index, w1, b1, w2, b2)
    jax.block_until_ready(out)
    assert out.shape == (N, OUT_DIM)
    print("KERNEL_OK")
</pallas_src>

<mosaic_0001>
module attributes {stable_mosaic.version = 11 : i64} {
  func.func @gcn_layer_kernel(%arg0: i32, %arg1: i32, %arg2: memref<128x128xbf16, #tpu.memory_space<vmem>>, %arg3: memref<128x128xbf16, #tpu.memory_space<vmem>>, %arg4: memref<128x128xbf16, #tpu.memory_space<vmem>>, %arg5: memref<1x128xf32, #tpu.memory_space<vmem>>, %arg6: memref<128x128xf32, #tpu.memory_space<vmem>>, %arg7: memref<128x128xf32, #tpu.memory_space<vmem>>) attributes {dimension_semantics = [#tpu.dimension_semantics<parallel>, #tpu.dimension_semantics<arbitrary>], iteration_bounds = array<i64: 1, 1>, scalar_prefetch = 0 : i64, scratch_operands = 1 : i64, tpu.core_type = #tpu.core_type<tc>, window_params = [{transform_indices = @transform_0, window_bounds = array<i64: 128, 128>}, {transform_indices = @transform_1, window_bounds = array<i64: 128, 128>}, {pipeline_mode = #tpu.pipeline_mode<synchronous>, transform_indices = @transform_2, window_bounds = array<i64: 128, 128>}, {pipeline_mode = #tpu.pipeline_mode<synchronous>, transform_indices = @transform_3, window_bounds = array<i64: 1, 128>}, {transform_indices = @transform_4, window_bounds = array<i64: 128, 128>}]} {
    %c0_i32 = arith.constant 0 : i32
    %0 = arith.cmpi eq, %arg1, %c0_i32 : i32
    %1 = arith.extui %0 : i1 to i32
    %c0_i32_0 = arith.constant 0 : i32
    %2 = arith.cmpi ne, %1, %c0_i32_0 : i32
    scf.if %2 {
      %cst_13 = arith.constant 0.000000e+00 : f32
      %15 = vector.broadcast %cst_13 : f32 to vector<128x128xf32>
      %c0_14 = arith.constant 0 : index
      %c0_15 = arith.constant 0 : index
      %16 = vector.load %arg7[%c0_14, %c0_15] : memref<128x128xf32, #tpu.memory_space<vmem>>, vector<128x128xf32>
      tpu.vector_store %arg7[%c0_14, %c0_15], %15 {strides = array<i32>} : memref<128x128xf32, #tpu.memory_space<vmem>>, vector<128x128xf32>,
    } else {
    }
    %c0 = arith.constant 0 : index
    %c0_1 = arith.constant 0 : index
    %3 = vector.load %arg3[%c0, %c0_1] : memref<128x128xbf16, #tpu.memory_space<vmem>>, vector<128x128xbf16>
    %c0_2 = arith.constant 0 : index
    %c0_3 = arith.constant 0 : index
    %4 = vector.load %arg4[%c0_2, %c0_3] : memref<128x128xbf16, #tpu.memory_space<vmem>>, vector<128x128xbf16>
    %cst = arith.constant dense<0.000000e+00> : vector<128x128xf32>
    %5 = tpu.matmul %3, %4, %cst {dimension_numbers = #tpu.dot_dimension_numbers<[1], [0], [0], [1], [0, 0, 1, 1], [], []>} : vector<128x128xbf16>, vector<128x128xbf16>, vector<128x128xf32> -> vector<128x128xf32>
    %c0_4 = arith.constant 0 : index
    %c0_5 = arith.constant 0 : index
    %6 = vector.load %arg7[%c0_4, %c0_5] : memref<128x128xf32, #tpu.memory_space<vmem>>, vector<128x128xf32>
    %c0_6 = arith.constant 0 : index
    %c0_7 = arith.constant 0 : index
    %7 = vector.load %arg2[%c0_6, %c0_7] : memref<128x128xbf16, #tpu.memory_space<vmem>>, vector<128x128xbf16>
    %8 = arith.truncf %5 : vector<128x128xf32> to vector<128x128xbf16>
    %cst_8 = arith.constant dense<0.000000e+00> : vector<128x128xf32>
    %9 = tpu.matmul %7, %8, %cst_8 {dimension_numbers = #tpu.dot_dimension_numbers<[1], [0], [0], [1], [0, 0, 1, 1], [], []>} : vector<128x128xbf16>, vector<128x128xbf16>, vector<128x128xf32> -> vector<128x128xf32>
    %10 = arith.addf %6, %9 : vector<128x128xf32>
    %c0_9 = arith.constant 0 : index
    %c0_10 = arith.constant 0 : index
    %11 = vector.load %arg7[%c0_9, %c0_10] : memref<128x128xf32, #tpu.memory_space<vmem>>, vector<128x128xf32>
    tpu.vector_store %arg7[%c0_9, %c0_10], %10 {strides = array<i32>} : memref<128x128xf32, #tpu.memory_space<vmem>>, vector<128x128xf32>,
    %c0_i32_11 = arith.constant 0 : i32
    %12 = arith.cmpi eq, %arg1, %c0_i32_11 : i32
    %13 = arith.extui %12 : i1 to i32
    %c0_i32_12 = arith.constant 0 : i32
    %14 = arith.cmpi ne, %13, %c0_i32_12 : i32
    scf.if %14 {
      %c0_13 = arith.constant 0 : index
      %c0_14 = arith.constant 0 : index
      %15 = vector.load %arg7[%c0_13, %c0_14] : memref<128x128xf32, #tpu.memory_space<vmem>>, vector<128x128xf32>
      %c0_15 = arith.constant 0 : index
      %c0_16 = arith.constant 0 : index
      %16 = vector.load %arg5[%c0_15, %c0_16] : memref<1x128xf32, #tpu.memory_space<vmem>>, vector<1x128xf32>
      %17 = vector.broadcast %16 : vector<1x128xf32> to vector<128x128xf32>
      %18 = arith.addf %15, %17 : vector<128x128xf32>
      %cst_17 = arith.constant 0.000000e+00 : f32
      %19 = vector.broadcast %cst_17 : f32 to vector<128x128xf32>
      %20 = arith.maximumf %18, %19 : vector<128x128xf32>
      %c0_18 = arith.constant 0 : index
      %c0_19 = arith.constant 0 : index
      %21 = vector.load %arg6[%c0_18, %c0_19] : memref<128x128xf32, #tpu.memory_space<vmem>>, vector<128x128xf32>
      tpu.vector_store %arg6[%c0_18, %c0_19], %20 {strides = array<i32>} : memref<128x128xf32, #tpu.memory_space<vmem>>, vector<128x128xf32>,
    } else {
    }
    return
  }
  func.func @transform_0(%arg0: i32, %arg1: i32) -> (i32, i32) {
    %c0_i32 = arith.constant 0 : i32
    return %arg0, %arg1 : i32, i32
  }
  func.func @transform_1(%arg0: i32, %arg1: i32) -> (i32, i32) {
    %c0_i32 = arith.constant 0 : i32
    %c0_i32_0 = arith.constant 0 : i32
    return %arg1, %c0_i32 : i32, i32
  }
  func.func @transform_2(%arg0: i32, %arg1: i32) -> (i32, i32) {
    %c0_i32 = arith.constant 0 : i32
    %c0_i32_0 = arith.constant 0 : i32
    %c0_i32_1 = arith.constant 0 : i32
    return %c0_i32, %c0_i32_0 : i32, i32
  }
  func.func @transform_3(%arg0: i32, %arg1: i32) -> (i32, i32) {
    %c0_i32 = arith.constant 0 : i32
    %c0_i32_0 = arith.constant 0 : i32
    %c0_i32_1 = arith.constant 0 : i32
    return %c0_i32, %c0_i32_0 : i32, i32
  }
  func.func @transform_4(%arg0: i32, %arg1: i32) -> (i32, i32) {
    %c0_i32 = arith.constant 0 : i32
    %c0_i32_0 = arith.constant 0 : i32
    return %arg0, %c0_i32 : i32, i32
  }
}

</mosaic_0001>

<llo_original>
// kernel: tpu_custom_call.1
$region0: #{tpu_custom_call.1}
  #allocation0 [shape = 'u32[]', space=smem, size = 0x4, offset = 0x4, fixed_abs, tag = 'smem constant byte address 0x4 - core index']
  #allocation1 [shape = 'u32[144,128]{1,0:T(1,128)}', space=vmem, size = 0x12000, scoped, tag = 'internal scratch']
  #allocation2 [shape = 'f32[128,128]{1,0:T(8,128)}', space=vmem, size = 0x10000, scoped, tag = 'scratch operand']
  %s0 = inlined_call_operand.hbm [shape: bf16[128,128], index: 0, kind: input, shape index: {}]
  %s1 = inlined_call_operand.hbm [shape: bf16[128,128], index: 1, kind: input, shape index: {}]
  %s2 = inlined_call_operand.hbm [shape: bf16[128,128], index: 2, kind: input, shape index: {}]
  %s3 = inlined_call_operand.vmem [shape: f32[1,128], index: 3, kind: input, shape index: {}]
  %s4 = inlined_call_operand.hbm [shape: f32[128,128], index: 4, kind: output, shape index: {}]
  %s5 = sld [smem:[#allocation0]]
  $region46: #{tpu_custom_call.1} parent=0
    _
  %s7 = ssub.s32 1, %s5
  %s8 = scalar_select 0, %s7, %s5
  $region1: #{tpu_custom_call.1} parent=0
    #allocation3 [shape = 'u8[32768]{0}', space=vmem, size = 0x8000, scoped, tag = 'input window, operand 0, single buffered']
    #allocation4 [shape = 's32[1]{0}', space=sflag, size = 0x4, scoped, tag = 'scoped memory for tpu_custom_call.1']
    #allocation5 [shape = 's32[1]{0}', space=sflag, size = 0x4, scoped, tag = 'scoped memory for tpu_custom_call.1']
    #allocation6 [shape = 'u8[32768]{0}', space=vmem, size = 0x8000, scoped, tag = 'input window, operand 1, single buffered']
    #allocation7 [shape = 's32[1]{0}', space=sflag, size = 0x4, scoped, tag = 'scoped memory for tpu_custom_call.1']
    #allocation8 [shape = 'u8[32768]{0}', space=vmem, size = 0x8000, scoped, tag = 'input window, operand 2, single buffered']
    #allocation9 [shape = 'u8[65536]{0}', space=vmem, size = 0x10000, scoped, tag = 'output window, operand 0, single buffered']
    %9 = vsyncpa [#allocation4], 0
    %10 = vsyncpa [#allocation7], 0
    %11 = vsyncpa [#allocation5], 0
    // Predicated region
    $region2: #{tpu_custom_call.1} parent=1 // pred_check
      _
    $region3: #{tpu_custom_call.1} parent=1 // pred_check_branch
      %13 = sbr.rel (0) target = $region5
    $region4: #{tpu_custom_call.1} parent=1 // pred_region
      %s15 = ssub.s32 1024, 1024
      %16 = vsyncadd [#allocation4], %s15
      %s17 = sshll.u32 [#allocation3], 4
      %s18 = int_to_ptr.vmem [resolvable:$true] %s17
      %23 = dma.hbm_to_vmem [thread:$0]  %s0, 1024, %s18, [#allocation4], 64, 64, 4
    $region5: #{tpu_custom_call.1} parent=1 // pred_fallthru
      _
    // Predicated region
    $region6: #{tpu_custom_call.1} parent=1 // pred_check
      _
    $region7: #{tpu_custom_call.1} parent=1 // pred_check_branch
      %25 = sbr.rel (0) target = $region9
    $region8: #{tpu_custom_call.1} parent=1 // pred_region
      %s27 = ssub.s32 1024, 1024
      %28 = vsyncadd [#allocation7], %s27
      %s29 = sshll.u32 [#allocation6], 4
      %s30 = int_to_ptr.vmem [resolvable:$true] %s29
      %35 = dma.hbm_to_vmem [thread:$0]  %s1, 1024, %s30, [#allocation7], 64, 64, 4
    $region9: #{tpu_custom_call.1} parent=1 // pred_fallthru
      _
    // Predicated region
    $region10: #{tpu_custom_call.1} parent=1 // pred_check
      _
    $region11: #{tpu_custom_call.1} parent=1 // pred_check_branch
      %37 = sbr.rel (0) target = $region13
    $region12: #{tpu_custom_call.1} parent=1 // pred_region
      %s39 = ssub.s32 1024, 1024
      %40 = vsyncadd [#allocation7], %s39
      %s41 = sshll.u32 [#allocation8], 4
      %s42 = int_to_ptr.vmem [resolvable:$true] %s41
      %47 = dma.hbm_to_vmem [thread:$0]  %s2, 1024, %s42, [#allocation7], 64, 64, 4
    $region13: #{tpu_custom_call.1} parent=1 // pred_fallthru
      _
    // Predicated region
    $region14: #{tpu_custom_call.1} parent=1 // pred_check
      _
    $region15: #{tpu_custom_call.1} parent=1 // pred_check_branch
      %49 = sbr.rel (0) target = $region17
    $region16: #{tpu_custom_call.1} parent=1 // pred_region
      _
    $region17: #{tpu_custom_call.1} parent=1 // pred_fallthru
      _
    // Predicated region
    $region18: #{tpu_custom_call.1} parent=1 // pred_check
      _
    $region19: #{tpu_custom_call.1} parent=1 // pred_check_branch
      %51 = sbr.rel (0) target = $region21
    $region20: #{tpu_custom_call.1} parent=1 // pred_region
      %52 = dma.done [#allocation4], 1024
    $region21: #{tpu_custom_call.1} parent=1 // pred_fallthru
      _
    // Predicated region
    $region22: #{tpu_custom_call.1} parent=1 // pred_check
      _
    $region23: #{tpu_custom_call.1} parent=1 // pred_check_branch
      %54 = sbr.rel (0) target = $region25
    $region24: #{tpu_custom_call.1} parent=1 // pred_region
      %55 = dma.done [#allocation7], 1024
    $region25: #{tpu_custom_call.1} parent=1 // pred_fallthru
      _
    // Predicated region
    $region26: #{tpu_custom_call.1} parent=1 // pred_check
      _
    $region27: #{tpu_custom_call.1} parent=1 // pred_check_branch
      %57 = sbr.rel (0) target = $region29
    $region28: #{tpu_custom_call.1} parent=1 // pred_region
      %58 = dma.done [#allocation7], 1024
    $region29: #{tpu_custom_call.1} parent=1 // pred_fallthru
      _
    %p60 = scmp.eq.s32.totalorder 0, 0
    // Predicated region
    $region30: #{tpu_custom_call.1} parent=1 // pred_check
      %p61 = pneg %p60
    $region31: #{tpu_custom_call.1} parent=1 // pred_check_branch
      %63 = sbr.rel (%p61) target = $region33
    $region32: #{tpu_custom_call.1} parent=1 // pred_region
      %64 = vst [vmem:[#allocation2] sm:$0xff] 0.0
      %65 = vst [vmem:[#allocation2 + $0x8] sm:$0xff] 0.0
      %66 = vst [vmem:[#allocation2 + $0x10] sm:$0xff] 0.0
      %67 = vst [vmem:[#allocation2 + $0x18] sm:$0xff] 0.0
      %68 = vst [vmem:[#allocation2 + $0x20] sm:$0xff] 0.0
      %69 = vst [vmem:[#allocation2 + $0x28] sm:$0xff] 0.0
      %70 = vst [vmem:[#allocation2 + $0x30] sm:$0xff] 0.0
      %71 = vst [vmem:[#allocation2 + $0x38] sm:$0xff] 0.0
      %72 = vst [vmem:[#allocation2 + $0x40] sm:$0xff] 0.0
      %73 = vst [vmem:[#allocation2 + $0x48] sm:$0xff] 0.0
      %74 = vst [vmem:[#allocation2 + $0x50] sm:$0xff] 0.0
      %75 = vst [vmem:[#allocation2 + $0x58] sm:$0xff] 0.0
      %76 = vst [vmem:[#allocation2 + $0x60] sm:$0xff] 0.0
      %77 = vst [vmem:[#allocation2 + $0x68] sm:$0xff] 0.0
      %78 = vst [vmem:[#allocation2 + $0x70] sm:$0xff] 0.0
      %79 = vst [vmem:[#allocation2 + $0x78] sm:$0xff] 0.0
    $region33: #{tpu_custom_call.1} parent=1 // pred_fallthru
      _
    %v80 = vld [vmem:[#allocation6] sm:$0xf]
    %v81 = vld [vmem:[#allocation6 + $0x4] sm:$0xf]
    %v82 = vld [vmem:[#allocation6 + $0x8] sm:$0xf]
    %v83 = vld [vmem:[#allocation6 + $0xc] sm:$0xf]
    %v84 = vld [vmem:[#allocation6 + $0x10] sm:$0xf]
    %v85 = vld [vmem:[#allocation6 + $0x14] sm:$0xf]
    %v86 = vld [vmem:[#allocation6 + $0x18] sm:$0xf]
    %v87 = vld [vmem:[#allocation6 + $0x1c] sm:$0xf]
    %v88 = vld [vmem:[#allocation6 + $0x20] sm:$0xf]
    %v89 = vld [vmem:[#allocation6 + $0x24] sm:$0xf]
    %v90 = vld [vmem:[#allocation6 + $0x28] sm:$0xf]
    %v91 = vld [vmem:[#allocation6 + $0x2c] sm:$0xf]
    %v92 = vld [vmem:[#allocation6 + $0x30] sm:$0xf]
    %v93 = vld [vmem:[#allocation6 + $0x34] sm:$0xf]
    %v94 = vld [vmem:[#allocation6 + $0x38] sm:$0xf]
    %v95 = vld [vmem:[#allocation6 + $0x3c] sm:$0xf]
    %v96 = vld [vmem:[#allocation8] sm:$0xf]
    %v97 = vld [vmem:[#allocation8 + $0x4] sm:$0xf]
    %v98 = vld [vmem:[#allocation8 + $0x8] sm:$0xf]
    %v99 = vld [vmem:[#allocation8 + $0xc] sm:$0xf]
    %v100 = vld [vmem:[#allocation8 + $0x10] sm:$0xf]
    %v101 = vld [vmem:[#allocation8 + $0x14] sm:$0xf]
    %v102 = vld [vmem:[#allocation8 + $0x18] sm:$0xf]
    %v103 = vld [vmem:[#allocation8 + $0x1c] sm:$0xf]
    %v104 = vld [vmem:[#allocation8 + $0x20] sm:$0xf]
    %v105 = vld [vmem:[#allocation8 + $0x24] sm:$0xf]
    %v106 = vld [vmem:[#allocation8 + $0x28] sm:$0xf]
    %v107 = vld [vmem:[#allocation8 + $0x2c] sm:$0xf]
    %v108 = vld [vmem:[#allocation8 + $0x30] sm:$0xf]
    %v109 = vld [vmem:[#allocation8 + $0x34] sm:$0xf]
    %v110 = vld [vmem:[#allocation8 + $0x38] sm:$0xf]
    %v111 = vld [vmem:[#allocation8 + $0x3c] sm:$0xf]
    %v128 = vunpack.c.l.b16 %v80
    %v129 = vunpack.c.l.b16 %v81
    %v130 = vunpack.c.l.b16 %v82
    %v131 = vunpack.c.l.b16 %v83
    %v132 = vunpack.c.l.b16 %v84
    %v133 = vunpack.c.l.b16 %v85
    %v134 = vunpack.c.l.b16 %v86
    %v135 = vunpack.c.l.b16 %v87
    %v136 = vunpack.c.l.b16 %v88
    %v137 = vunpack.c.l.b16 %v89
    %v138 = vunpack.c.l.b16 %v90
    %v139 = vunpack.c.l.b16 %v91
    %v140 = vunpack.c.l.b16 %v92
    %v141 = vunpack.c.l.b16 %v93
    %v142 = vunpack.c.l.b16 %v94
    %v143 = vunpack.c.l.b16 %v95
    %v144 = vpack.c.b16 %v129, %v128
    %v145 = vpack.c.b16 %v131, %v130
    %v146 = vpack.c.b16 %v133, %v132
    %v147 = vpack.c.b16 %v135, %v134
    %v148 = vpack.c.b16 %v137, %v136
    %v149 = vpack.c.b16 %v139, %v138
    %v150 = vpack.c.b16 %v141, %v140
    %v151 = vpack.c.b16 %v143, %v142
    %v176 = vunpack.c.l.b16 %v96
    %v177 = vunpack.c.l.b16 %v97
    %v178 = vunpack.c.l.b16 %v98
    %v179 = vunpack.c.l.b16 %v99
    %v180 = vunpack.c.l.b16 %v100
    %v181 = vunpack.c.l.b16 %v101
    %v182 = vunpack.c.l.b16 %v102
    %v183 = vunpack.c.l.b16 %v103
    %v184 = vunpack.c.l.b16 %v104
    %v185 = vunpack.c.l.b16 %v105
    %v186 = vunpack.c.l.b16 %v106
    %v187 = vunpack.c.l.b16 %v107
    %v188 = vunpack.c.l.b16 %v108
    %v189 = vunpack.c.l.b16 %v109
    %v190 = vunpack.c.l.b16 %v110
    %v191 = vunpack.c.l.b16 %v111
    %v192 = vpack.c.b16 %v177, %v176
    %v193 = vpack.c.b16 %v179, %v178
    %v194 = vpack.c.b16 %v181, %v180
    %v195 = vpack.c.b16 %v183, %v182
    %v196 = vpack.c.b16 %v185, %v184
    %v197 = vpack.c.b16 %v187, %v186
    %v198 = vpack.c.b16 %v189, %v188
    %v199 = vpack.c.b16 %v191, %v190
    %208 = vmatprep.subr.bf16.mxu0 0
    %209 = vmatpush1.bf16.msra.mxu0 %v192
    %210 = vmatprep.subr.bf16.mxu0 0
    %211 = vmatpush1.bf16.msra.mxu0 %v193
    %212 = vmatprep.subr.bf16.mxu0 0
    %213 = vmatpush1.bf16.msra.mxu0 %v194
    %214 = vmatprep.subr.bf16.mxu0 0
    %215 = vmatpush1.bf16.msra.mxu0 %v195
    %216 = vmatprep.subr.bf16.mxu0 0
    %217 = vmatpush1.bf16.msra.mxu0 %v196
    %218 = vmatprep.subr.bf16.mxu0 0
    %219 = vmatpush1.bf16.msra.mxu0 %v197
    %220 = vmatprep.subr.bf16.mxu0 0
    %221 = vmatpush1.bf16.msra.mxu0 %v198
    %222 = vmatprep.subr.bf16.mxu0 0
    %223 = vmatpush1.bf16.msra.mxu0 %v199
    %224 = vmatprep.subr.bf16.mxu0 0
    %225 = vmatpush1.bf16.msra.mxu0 0
    %226 = vmatprep.subr.bf16.mxu0 0
    %227 = vmatpush1.bf16.msra.mxu0 0
    %228 = vmatprep.subr.bf16.mxu0 0
    %229 = vmatpush1.bf16.msra.mxu0 0
    %230 = vmatprep.subr.bf16.mxu0 0
    %231 = vmatpush1.bf16.msra.mxu0 0
    %232 = vmatprep.subr.bf16.mxu0 0
    %233 = vmatpush1.bf16.msra.mxu0 0
    %234 = vmatprep.subr.bf16.mxu0 0
    %235 = vmatpush1.bf16.msra.mxu0 0
    %236 = vmatprep.subr.bf16.mxu0 0
    %237 = vmatpush1.bf16.msra.mxu0 0
    %238 = vmatprep.subr.bf16.mxu0 0
    %239 = vmatpush1.bf16.msra.mxu0 0
    %240 = vmatprep.mubr.bf16.mxu0 0
    %241 = vmatmul.mubr.bf16.gmra.mrb[0].mxu0 %v144
    %v242 = vpop.f32.mrb[0].mxu0
    %v243 = vadd.f32 0.0, %v242
    %v244 = vpop.f32.mrb[0].mxu0
    %v245 = vpop.f32.mrb[0].mxu0
    %v246 = vadd.f32 0.0, %v245
    %v247 = vpop.f32.mrb[0].mxu0
    %248 = vmatprep.mubr.bf16.mxu0 0
    %249 = vmatmul.mubr.bf16.gmra.mrb[0].mxu0 %v145
    %v250 = vpop.f32.mrb[0].mxu0
    %v251 = vadd.f32 0.0, %v250
    %v252 = vpop.f32.mrb[0].mxu0
    %v253 = vpop.f32.mrb[0].mxu0
    %v254 = vadd.f32 0.0, %v253
    %v255 = vpop.f32.mrb[0].mxu0
    %256 = vmatprep.mubr.bf16.mxu0 0
    %257 = vmatmul.mubr.bf16.gmra.mrb[0].mxu0 %v146
    %v258 = vpop.f32.mrb[0].mxu0
    %v259 = vadd.f32 0.0, %v258
    %v260 = vpop.f32.mrb[0].mxu0
    %v261 = vpop.f32.mrb[0].mxu0
    %v262 = vadd.f32 0.0, %v261
    %v263 = vpop.f32.mrb[0].mxu0
    %264 = vmatprep.mubr.bf16.mxu0 0
    %265 = vmatmul.mubr.bf16.gmra.mrb[0].mxu0 %v147
    %v266 = vpop.f32.mrb[0].mxu0
    %v267 = vadd.f32 0.0, %v266
    %v268 = vpop.f32.mrb[0].mxu0
    %v269 = vpop.f32.mrb[0].mxu0
    %v270 = vadd.f32 0.0, %v269
    %v271 = vpop.f32.mrb[0].mxu0
    %272 = vmatprep.mubr.bf16.mxu0 0
    %273 = vmatmul.mubr.bf16.gmra.mrb[0].mxu0 %v148
    %v274 = vpop.f32.mrb[0].mxu0
    %v275 = vadd.f32 0.0, %v274
    %v276 = vpop.f32.mrb[0].mxu0
    %v277 = vpop.f32.mrb[0].mxu0
    %v278 = vadd.f32 0.0, %v277
    %v279 = vpop.f32.mrb[0].mxu0
    %280 = vmatprep.mubr.bf16.mxu0 0
    %281 = vmatmul.mubr.bf16.gmra.mrb[0].mxu0 %v149
    %v282 = vpop.f32.mrb[0].mxu0
    %v283 = vadd.f32 0.0, %v282
    %v284 = vpop.f32.mrb[0].mxu0
    %v285 = vpop.f32.mrb[0].mxu0
    %v286 = vadd.f32 0.0, %v285
    %v287 = vpop.f32.mrb[0].mxu0
    %288 = vmatprep.mubr.bf16.mxu0 0
    %289 = vmatmul.mubr.bf16.gmra.mrb[0].mxu0 %v150
    %v290 = vpop.f32.mrb[0].mxu0
    %v291 = vadd.f32 0.0, %v290
    %v292 = vpop.f32.mrb[0].mxu0
    %v293 = vpop.f32.mrb[0].mxu0
    %v294 = vadd.f32 0.0, %v293
    %v295 = vpop.f32.mrb[0].mxu0
    %296 = vmatprep.mubr.bf16.mxu0 0
    %297 = vmatmul.mubr.bf16.gmra.mrb[0].mxu0 %v151
    %v298 = vpop.f32.mrb[0].mxu0
    %v299 = vadd.f32 0.0, %v298
    %v300 = vpop.f32.mrb[0].mxu0
    %v301 = vpop.f32.mrb[0].mxu0
    %v302 = vadd.f32 0.0, %v301
    %v303 = vpop.f32.mrb[0].mxu0
    %304 = vdwg.mxu0
    %v305 = vld [vmem:[#allocation2] sm:$0xff]
    %v306 = vld [vmem:[#allocation2 + $0x8] sm:$0xff]
    %v307 = vld [vmem:[#allocation2 + $0x10] sm:$0xff]
    %v308 = vld [vmem:[#allocation2 + $0x18] sm:$0xff]
    %v309 = vld [vmem:[#allocation2 + $0x20] sm:$0xff]
    %v310 = vld [vmem:[#allocation2 + $0x28] sm:$0xff]
    %v311 = vld [vmem:[#allocation2 + $0x30] sm:$0xff]
    %v312 = vld [vmem:[#allocation2 + $0x38] sm:$0xff]
    %v313 = vld [vmem:[#allocation2 + $0x40] sm:$0xff]
    %v314 = vld [vmem:[#allocation2 + $0x48] sm:$0xff]
    %v315 = vld [vmem:[#allocation2 + $0x50] sm:$0xff]
    %v316 = vld [vmem:[#allocation2 + $0x58] sm:$0xff]
    %v317 = vld [vmem:[#allocation2 + $0x60] sm:$0xff]
    %v318 = vld [vmem:[#allocation2 + $0x68] sm:$0xff]
    %v319 = vld [vmem:[#allocation2 + $0x70] sm:$0xff]
    %v320 = vld [vmem:[#allocation2 + $0x78] sm:$0xff]
    %v321 = vld [vmem:[#allocation3] sm:$0xf]
    %v322 = vld [vmem:[#allocation3 + $0x4] sm:$0xf]
    %v323 = vld [vmem:[#allocation3 + $0x8] sm:$0xf]
    %v324 = vld [vmem:[#allocation3 + $0xc] sm:$0xf]
    %v325 = vld [vmem:[#allocation3 + $0x10] sm:$0xf]
    %v326 = vld [vmem:[#allocation3 + $0x14] sm:$0xf]
    %v327 = vld [vmem:[#allocation3 + $0x18] sm:$0xf]
    %v328 = vld [vmem:[#allocation3 + $0x1c] sm:$0xf]
    %v329 = vld [vmem:[#allocation3 + $0x20] sm:$0xf]
    %v330 = vld [vmem:[#allocation3 + $0x24] sm:$0xf]
    %v331 = vld [vmem:[#allocation3 + $0x28] sm:$0xf]
    %v332 = vld [vmem:[#allocation3 + $0x2c] sm:$0xf]
    %v333 = vld [vmem:[#allocation3 + $0x30] sm:$0xf]
    %v334 = vld [vmem:[#allocation3 + $0x34] sm:$0xf]
    %v335 = vld [vmem:[#allocation3 + $0x38] sm:$0xf]
    %v336 = vld [vmem:[#allocation3 + $0x3c] sm:$0xf]
    %v337 = vpack.c.bf16 %v246, %v243
    %v338 = vpack.c.bf16 %v254, %v251
    %v339 = vpack.c.bf16 %v262, %v259
    %v340 = vpack.c.bf16 %v270, %v267
    %v341 = vpack.c.bf16 %v278, %v275
    %v342 = vpack.c.bf16 %v286, %v283
    %v343 = vpack.c.bf16 %v294, %v291
    %v344 = vpack.c.bf16 %v302, %v299
    %v361 = vunpack.c.l.b16 %v321
    %v362 = vunpack.c.l.b16 %v322
    %v363 = vunpack.c.l.b16 %v323
    %v364 = vunpack.c.l.b16 %v324
    %v365 = vunpack.c.l.b16 %v325
    %v366 = vunpack.c.l.b16 %v326
    %v367 = vunpack.c.l.b16 %v327
    %v368 = vunpack.c.l.b16 %v328
    %v369 = vunpack.c.l.b16 %v329
    %v370 = vunpack.c.l.b16 %v330
    %v371 = vunpack.c.l.b16 %v331
    %v372 = vunpack.c.l.b16 %v332
    %v373 = vunpack.c.l.b16 %v333
    %v374 = vunpack.c.l.b16 %v334
    %v375 = vunpack.c.l.b16 %v335
    %v376 = vunpack.c.l.b16 %v336
    %v377 = vpack.c.b16 %v362, %v361
    %v378 = vpack.c.b16 %v364, %v363
    %v379 = vpack.c.b16 %v366, %v365
    %v380 = vpack.c.b16 %v368, %v367
    %v381 = vpack.c.b16 %v370, %v369
    %v382 = vpack.c.b16 %v372, %v371
    %v383 = vpack.c.b16 %v374, %v373
    %v384 = vpack.c.b16 %v376, %v375
    %393 = vmatprep.subr.bf16.mxu0 0
    %394 = vmatpush1.bf16.msra.mxu0 %v337
    %395 = vmatprep.subr.bf16.mxu0 0
    %396 = vmatpush1.bf16.msra.mxu0 %v338
    %397 = vmatprep.subr.bf16.mxu0 0
    %398 = vmatpush1.bf16.msra.mxu0 %v339
    %399 = vmatprep.subr.bf16.mxu0 0
    %400 = vmatpush1.bf16.msra.mxu0 %v340
    %401 = vmatprep.subr.bf16.mxu0 0
    %402 = vmatpush1.bf16.msra.mxu0 %v341
    %403 = vmatprep.subr.bf16.mxu0 0
    %404 = vmatpush1.bf16.msra.mxu0 %v342
    %405 = vmatprep.subr.bf16.mxu0 0
    %406 = vmatpush1.bf16.msra.mxu0 %v343
    %407 = vmatprep.subr.bf16.mxu0 0
    %408 = vmatpush1.bf16.msra.mxu0 %v344
    %409 = vmatprep.subr.bf16.mxu0 0
    %410 = vmatpush1.bf16.msra.mxu0 0
    %411 = vmatprep.subr.bf16.mxu0 0
    %412 = vmatpush1.bf16.msra.mxu0 0
    %413 = vmatprep.subr.bf16.mxu0 0
    %414 = vmatpush1.bf16.msra.mxu0 0
    %415 = vmatprep.subr.bf16.mxu0 0
    %416 = vmatpush1.bf16.msra.mxu0 0
    %417 = vmatprep.subr.bf16.mxu0 0
    %418 = vmatpush1.bf16.msra.mxu0 0
    %419 = vmatprep.subr.bf16.mxu0 0
    %420 = vmatpush1.bf16.msra.mxu0 0
    %421 = vmatprep.subr.bf16.mxu0 0
    %422 = vmatpush1.bf16.msra.mxu0 0
    %423 = vmatprep.subr.bf16.mxu0 0
    %424 = vmatpush1.bf16.msra.mxu0 0
    %425 = vmatprep.mubr.bf16.mxu0 0
    %426 = vmatmul.mubr.bf16.gmra.mrb[0].mxu0 %v377
    %v427 = vpop.f32.mrb[0].mxu0
    %v428 = vadd.f32 0.0, %v427
    %v429 = vpop.f32.mrb[0].mxu0
    %v430 = vpop.f32.mrb[0].mxu0
    %v431 = vadd.f32 0.0, %v430
    %v432 = vpop.f32.mrb[0].mxu0
    %433 = vmatprep.mubr.bf16.mxu0 0
    %434 = vmatmul.mubr.bf16.gmra.mrb[0].mxu0 %v378
    %v435 = vpop.f32.mrb[0].mxu0
    %v436 = vadd.f32 0.0, %v435
    %v437 = vpop.f32.mrb[0].mxu0
    %v438 = vpop.f32.mrb[0].mxu0
    %v439 = vadd.f32 0.0, %v438
    %v440 = vpop.f32.mrb[0].mxu0
    %441 = vmatprep.mubr.bf16.mxu0 0
    %442 = vmatmul.mubr.bf16.gmra.mrb[0].mxu0 %v379
    %v443 = vpop.f32.mrb[0].mxu0
    %v444 = vadd.f32 0.0, %v443
    %v445 = vpop.f32.mrb[0].mxu0
    %v446 = vpop.f32.mrb[0].mxu0
    %v447 = vadd.f32 0.0, %v446
    %v448 = vpop.f32.mrb[0].mxu0
    %449 = vmatprep.mubr.bf16.mxu0 0
    %450 = vmatmul.mubr.bf16.gmra.mrb[0].mxu0 %v380
    %v451 = vpop.f32.mrb[0].mxu0
    %v452 = vadd.f32 0.0, %v451
    %v453 = vpop.f32.mrb[0].mxu0
    %v454 = vpop.f32.mrb[0].mxu0
    %v455 = vadd.f32 0.0, %v454
    %v456 = vpop.f32.mrb[0].mxu0
    %457 = vmatprep.mubr.bf16.mxu0 0
    %458 = vmatmul.mubr.bf16.gmra.mrb[0].mxu0 %v381
    %v459 = vpop.f32.mrb[0].mxu0
    %v460 = vadd.f32 0.0, %v459
    %v461 = vpop.f32.mrb[0].mxu0
    %v462 = vpop.f32.mrb[0].mxu0
    %v463 = vadd.f32 0.0, %v462
    %v464 = vpop.f32.mrb[0].mxu0
    %465 = vmatprep.mubr.bf16.mxu0 0
    %466 = vmatmul.mubr.bf16.gmra.mrb[0].mxu0 %v382
    %v467 = vpop.f32.mrb[0].mxu0
    %v468 = vadd.f32 0.0, %v467
    %v469 = vpop.f32.mrb[0].mxu0
    %v470 = vpop.f32.mrb[0].mxu0
    %v471 = vadd.f32 0.0, %v470
    %v472 = vpop.f32.mrb[0].mxu0
    %473 = vmatprep.mubr.bf16.mxu0 0
    %474 = vmatmul.mubr.bf16.gmra.mrb[0].mxu0 %v383
    %v475 = vpop.f32.mrb[0].mxu0
    %v476 = vadd.f32 0.0, %v475
    %v477 = vpop.f32.mrb[0].mxu0
    %v478 = vpop.f32.mrb[0].mxu0
    %v479 = vadd.f32 0.0, %v478
    %v480 = vpop.f32.mrb[0].mxu0
    %481 = vmatprep.mubr.bf16.mxu0 0
    %482 = vmatmul.mubr.bf16.gmra.mrb[0].mxu0 %v384
    %v483 = vpop.f32.mrb[0].mxu0
    %v484 = vadd.f32 0.0, %v483
    %v485 = vpop.f32.mrb[0].mxu0
    %v486 = vpop.f32.mrb[0].mxu0
    %v487 = vadd.f32 0.0, %v486
    %v488 = vpop.f32.mrb[0].mxu0
    %489 = vdwg.mxu0
    %v490 = vadd.f32 %v305, %v428
    %v491 = vadd.f32 %v306, %v431
    %v492 = vadd.f32 %v307, %v436
    %v493 = vadd.f32 %v308, %v439
    %v494 = vadd.f32 %v309, %v444
    %v495 = vadd.f32 %v310, %v447
    %v496 = vadd.f32 %v311, %v452
    %v497 = vadd.f32 %v312, %v455
    %v498 = vadd.f32 %v313, %v460
    %v499 = vadd.f32 %v314, %v463
    %v500 = vadd.f32 %v315, %v468
    %v501 = vadd.f32 %v316, %v471
    %v502 = vadd.f32 %v317, %v476
    %v503 = vadd.f32 %v318, %v479
    %v504 = vadd.f32 %v319, %v484
    %v505 = vadd.f32 %v320, %v487
    %506 = vst [vmem:[#allocation2] sm:$0xff] %v490
    %507 = vst [vmem:[#allocation2 + $0x8] sm:$0xff] %v491
    %508 = vst [vmem:[#allocation2 + $0x10] sm:$0xff] %v492
    %509 = vst [vmem:[#allocation2 + $0x18] sm:$0xff] %v493
    %510 = vst [vmem:[#allocation2 + $0x20] sm:$0xff] %v494
    %511 = vst [vmem:[#allocation2 + $0x28] sm:$0xff] %v495
    %512 = vst [vmem:[#allocation2 + $0x30] sm:$0xff] %v496
    %513 = vst [vmem:[#allocation2 + $0x38] sm:$0xff] %v497
    %514 = vst [vmem:[#allocation2 + $0x40] sm:$0xff] %v498
    %515 = vst [vmem:[#allocation2 + $0x48] sm:$0xff] %v499
    %516 = vst [vmem:[#allocation2 + $0x50] sm:$0xff] %v500
    %517 = vst [vmem:[#allocation2 + $0x58] sm:$0xff] %v501
    %518 = vst [vmem:[#allocation2 + $0x60] sm:$0xff] %v502
    %519 = vst [vmem:[#allocation2 + $0x68] sm:$0xff] %v503
    %520 = vst [vmem:[#allocation2 + $0x70] sm:$0xff] %v504
    %521 = vst [vmem:[#allocation2 + $0x78] sm:$0xff] %v505
    // Predicated region
    $region34: #{tpu_custom_call.1} parent=1 // pred_check
      %p522 = pneg %p60
    $region35: #{tpu_custom_call.1} parent=1 // pred_check_branch
      %524 = sbr.rel (%p522) target = $region37
    $region36: #{tpu_custom_call.1} parent=1 // pred_region
      %v525 = vld [vmem:[#allocation2] sm:$0xff]
      %v526 = vld [vmem:[#allocation2 + $0x8] sm:$0xff]
      %v527 = vld [vmem:[#allocation2 + $0x10] sm:$0xff]
      %v528 = vld [vmem:[#allocation2 + $0x18] sm:$0xff]
      %v529 = vld [vmem:[#allocation2 + $0x20] sm:$0xff]
      %v530 = vld [vmem:[#allocation2 + $0x28] sm:$0xff]
      %v531 = vld [vmem:[#allocation2 + $0x30] sm:$0xff]
      %v532 = vld [vmem:[#allocation2 + $0x38] sm:$0xff]
      %v533 = vld [vmem:[#allocation2 + $0x40] sm:$0xff]
      %v534 = vld [vmem:[#allocation2 + $0x48] sm:$0xff]
      %v535 = vld [vmem:[#allocation2 + $0x50] sm:$0xff]
      %v536 = vld [vmem:[#allocation2 + $0x58] sm:$0xff]
      %v537 = vld [vmem:[#allocation2 + $0x60] sm:$0xff]
      %v538 = vld [vmem:[#allocation2 + $0x68] sm:$0xff]
      %v539 = vld [vmem:[#allocation2 + $0x70] sm:$0xff]
      %v540 = vld [vmem:[#allocation2 + $0x78] sm:$0xff]
      %v541 = vld [vmem:[%s3] sm:$0x1]
      %v543 = vlaneseq
      %v544 = vshrl.u32 %v543, 7
      %v545 = vsub.s32 0, %v544
      %v546 = vrot.slane %v541, %v545
      %v548 = vadd.f32 %v525, %v546
      %v549 = vadd.f32 %v526, %v546
      %v550 = vadd.f32 %v527, %v546
      %v551 = vadd.f32 %v528, %v546
      %v552 = vadd.f32 %v529, %v546
      %v553 = vadd.f32 %v530, %v546
      %v554 = vadd.f32 %v531, %v546
      %v555 = vadd.f32 %v532, %v546
      %v556 = vadd.f32 %v533, %v546
      %v557 = vadd.f32 %v534, %v546
      %v558 = vadd.f32 %v535, %v546
      %v559 = vadd.f32 %v536, %v546
      %v560 = vadd.f32 %v537, %v546
      %v561 = vadd.f32 %v538, %v546
      %v562 = vadd.f32 %v539, %v546
      %v563 = vadd.f32 %v540, %v546
      %v564 = vmax.f32 %v548, 0.0
      %v565 = vmax.f32 %v549, 0.0
      %v566 = vmax.f32 %v550, 0.0
      %v567 = vmax.f32 %v551, 0.0
      %v568 = vmax.f32 %v552, 0.0
      %v569 = vmax.f32 %v553, 0.0
      %v570 = vmax.f32 %v554, 0.0
      %v571 = vmax.f32 %v555, 0.0
      %v572 = vmax.f32 %v556, 0.0
      %v573 = vmax.f32 %v557, 0.0
      %v574 = vmax.f32 %v558, 0.0
      %v575 = vmax.f32 %v559, 0.0
      %v576 = vmax.f32 %v560, 0.0
      %v577 = vmax.f32 %v561, 0.0
      %v578 = vmax.f32 %v562, 0.0
      %v579 = vmax.f32 %v563, 0.0
      %580 = vst [vmem:[#allocation9] sm:$0xff] %v564
      %581 = vst [vmem:[#allocation9 + $0x8] sm:$0xff] %v565
      %582 = vst [vmem:[#allocation9 + $0x10] sm:$0xff] %v566
      %583 = vst [vmem:[#allocation9 + $0x18] sm:$0xff] %v567
      %584 = vst [vmem:[#allocation9 + $0x20] sm:$0xff] %v568
      %585 = vst [vmem:[#allocation9 + $0x28] sm:$0xff] %v569
      %586 = vst [vmem:[#allocation9 + $0x30] sm:$0xff] %v570
      %587 = vst [vmem:[#allocation9 + $0x38] sm:$0xff] %v571
      %588 = vst [vmem:[#allocation9 + $0x40] sm:$0xff] %v572
      %589 = vst [vmem:[#allocation9 + $0x48] sm:$0xff] %v573
      %590 = vst [vmem:[#allocation9 + $0x50] sm:$0xff] %v574
      %591 = vst [vmem:[#allocation9 + $0x58] sm:$0xff] %v575
      %592 = vst [vmem:[#allocation9 + $0x60] sm:$0xff] %v576
      %593 = vst [vmem:[#allocation9 + $0x68] sm:$0xff] %v577
      %594 = vst [vmem:[#allocation9 + $0x70] sm:$0xff] %v578
      %595 = vst [vmem:[#allocation9 + $0x78] sm:$0xff] %v579
    $region37: #{tpu_custom_call.1} parent=1 // pred_fallthru
      _
    // Predicated region
    $region38: #{tpu_custom_call.1} parent=1 // pred_check
      _
    $region39: #{tpu_custom_call.1} parent=1 // pred_check_branch
      %597 = sbr.rel (0) target = $region41
    $region40: #{tpu_custom_call.1} parent=1 // pred_region
      %s599 = ssub.s32 2048, 2048
      %600 = vsyncadd [#allocation5], %s599
      %s601 = sshll.u32 [#allocation9], 4
      %s602 = int_to_ptr.vmem [resolvable:$true] %s601
      %607 = dma.vmem_to_hbm [thread:$0]  %s602, 2048, %s4, [#allocation5], 128, 128, 8
    $region41: #{tpu_custom_call.1} parent=1 // pred_fallthru
      _
    // Predicated region
    $region42: #{tpu_custom_call.1} parent=1 // pred_check
      _
    $region43: #{tpu_custom_call.1} parent=1 // pred_check_branch
      %609 = sbr.rel (0) target = $region45
    $region44: #{tpu_custom_call.1} parent=1 // pred_region
      %610 = dma.done [#allocation5], 2048
    $region45: #{tpu_custom_call.1} parent=1 // pred_fallthru
      _
    %611 = vsyncpa [#allocation4], 1
    %612 = vsyncpa [#allocation7], 1
    %613 = vsyncpa [#allocation5], 1

</llo_original>
